<compile_context>
chip_gen: v6e
topology: v6e:2x2x1
jax: 0.10.0
libtpu: 0.0.40
codegen_flags: <defaults>
</compile_context>

<pallas_src>
import jax
import jax.numpy as jnp
import numpy as np
from jax.experimental import pallas as pl
from jax.experimental.pallas import tpu as pltpu

# ---------------- config (mirrors cfg.* in the PyTorch module) ----------------
OBS_DIM = 16
ACTION_DIM = 8
HIDDEN_DIM = 32
HIDDEN_DEPTH = 2                 # -> Linear, ReLU, Linear, ReLU, Linear
LOG_STD_BOUNDS = (-10.0, 2.0)    # typical SAC cfg.log_std_bounds
BATCH = 8

# -------- packed-parameter slab layout (lane width = 128, bf16 storage) -------
LANES = 128                       # lane-dense width for all weights/activations
ALIGN = 16                        # bf16 sublane tile; batch tiles / row offsets
R_W0 = 0                          # (OBS_DIM, LANES)  : w0 in cols [0, HIDDEN)
R_W1 = R_W0 + OBS_DIM             # (LANES, LANES)    : w1 in [0:H, 0:H)
R_W2 = R_W1 + LANES               # (LANES, LANES)    : head = [mu | log_std | 0]
R_B0 = R_W2 + LANES               # 1 row used; 16-row aligned for bf16 tiling
R_B1 = R_B0 + ALIGN
R_B2 = R_B1 + ALIGN
TOTAL_ROWS = R_B2 + ALIGN         # 320 rows, multiple of the bf16 sublane tile


def pack_params(params):
    """Pack (w0,b0,w1,b1,w2,b2) into one bf16 (TOTAL_ROWS, 128) slab.

    Head weight w2: (HIDDEN, 2*ACTION_DIM) sits in lanes [0, 2A) so the final
    matmul directly yields:
      lanes [0, A)    pre-activation for mu
      lanes [A, 2A)   pre-activation for log_std
      lanes >= 2A     zero columns (their head output is garbage, never read)
    All padding is zero, so the padded matmuls are exactly equivalent.
    """
    w0, b0, w1, b1, w2, b2 = params
    A, H = ACTION_DIM, HIDDEN_DIM
    slab = jnp.zeros((TOTAL_ROWS, LANES), jnp.float32)
    slab = slab.at[R_W0:R_W0 + OBS_DIM, 0:H].set(w0)
    slab = slab.at[R_W1:R_W1 + H, 0:H].set(w1)
    slab = slab.at[R_W2:R_W2 + H, 0:2 * A].set(w2)
    slab = slab.at[R_B0, 0:H].set(b0[0])
    slab = slab.at[R_B1, 0:H].set(b1[0])
    slab = slab.at[R_B2, 0:2 * A].set(b2[0])
    return slab.astype(jnp.bfloat16)


def actor_kernel(obs_ref, p_ref, out_ref):
    """Trunk MLP + tanh/rescale/exp head for one (TB, OBS_DIM) batch tile."""
    x = obs_ref[...].astype(jnp.bfloat16)                       # (TB, OBS_DIM)

    # hidden layer 0: Linear + ReLU (bf16 MXU inputs, f32 accumulate)
    w0 = p_ref[R_W0:R_W0 + OBS_DIM, :]
    b0 = p_ref[R_B0:R_B0 + 1, :].astype(jnp.float32)
    h = jnp.dot(x, w0, preferred_element_type=jnp.float32) + b0
    h = jnp.maximum(h, 0.0).astype(jnp.bfloat16)                # (TB, 128)

    # hidden layer 1: Linear + ReLU
    w1 = p_ref[R_W1:R_W1 + LANES, :]
    b1 = p_ref[R_B1:R_B1 + 1, :].astype(jnp.float32)
    h = jnp.dot(h, w1, preferred_element_type=jnp.float32) + b1
    h = jnp.maximum(h, 0.0).astype(jnp.bfloat16)

    # output layer: lanes [0,A)=mu pre-act, [A,2A)=log_std pre-act, rest zero
    w2 = p_ref[R_W2:R_W2 + LANES, :]
    b2 = p_ref[R_B2:R_B2 + 1, :].astype(jnp.float32)
    out = jnp.dot(h, w2, preferred_element_type=jnp.float32) + b2   # (TB,128) f32

    # head, evaluated vector-wide in f32 (VPU/EUP only, no cross-lane movement),
    # selected per lane with a single where, then cast to bf16 for a single
    # unmasked 128-lane store.  Lanes >= 2A hold garbage (sliced off outside).
    ls_min, ls_max = LOG_STD_BOUNDS
    std = jnp.exp(ls_min + 0.5 * (ls_max - ls_min) * (jnp.tanh(out) + 1.0))
    lane = jax.lax.broadcasted_iota(jnp.int32, out.shape, 1)
    out_ref[...] = jnp.where(lane < ACTION_DIM, out, std).astype(out_ref.dtype)


def _pick_batch_tile(B, block_rows, min_tiles):
    """16-row-aligned batch tile, preferring (a) a divisor of B (no padding
    copy) and (b) at least `min_tiles` grid steps (v7x megacore) when B allows."""
    block_rows = max(ALIGN, (block_rows // ALIGN) * ALIGN)
    if B >= ALIGN * min_tiles:
        cap = min(block_rows, (B // (ALIGN * min_tiles)) * ALIGN)
    else:
        cap = ALIGN
    cap = max(cap, ALIGN)
    t = cap
    while t >= ALIGN:                      # trace-time only; <= cap/16 iters
        if B % t == 0:
            return t
        t -= ALIGN
    return cap                             # fall back to (small) tail padding


def diag_gaussian_actor(obs, packed_params, *, block_rows=4096, min_tiles=2):
    """Returns (mu, std, tanh(mu)) — SquashedNormal parameters + squashed mean."""
    B = obs.shape[0]
    tb = _pick_batch_tile(B, block_rows, min_tiles)
    b_pad = pl.cdiv(B, tb) * tb
    if b_pad != B:
        # Only triggers for awkward B (tile preferentially divides B).
        obs = jnp.pad(obs, ((0, b_pad - B), (0, 0)))
    grid = (b_pad // tb,)

    obs_bytes = b_pad * OBS_DIM * jnp.dtype(obs.dtype).itemsize
    cost = pl.CostEstimate(
        flops=2 * b_pad * LANES * (OBS_DIM + 2 * LANES),
        transcendentals=2 * b_pad * LANES,              # tanh + exp per lane
        bytes_accessed=obs_bytes + TOTAL_ROWS * LANES * 2 + b_pad * LANES * 2,
    )

    out = pl.pallas_call(
        actor_kernel,
        out_shape=jax.ShapeDtypeStruct((b_pad, LANES), jnp.bfloat16),
        grid=grid,
        in_specs=[
            pl.BlockSpec((tb, OBS_DIM), lambda i: (i, 0)),
            # constant block index -> parameter slab stays VMEM resident;
            # single-buffered since it is never re-fetched.
            pl.BlockSpec((TOTAL_ROWS, LANES), lambda i: (0, 0),
                         pipeline_mode=pl.Buffered(1)),
        ],
        out_specs=pl.BlockSpec((tb, LANES), lambda i: (i, 0)),
        compiler_params=pltpu.CompilerParams(
            dimension_semantics=("parallel",)),
        cost_estimate=cost,
    )(obs, packed_params)

    A = ACTION_DIM
    mu = out[:B, :A].astype(jnp.float32)
    std = out[:B, A:2 * A].astype(jnp.float32)
    return mu, std, jnp.tanh(mu)


def init_params(key):
    """Deterministic synthetic weights for MLP(obs_dim, [hidden]*depth, 2*action_dim)."""
    k0, k1, k2 = jax.random.split(key, 3)

    def lin(k, fan_in, fan_out):
        w = jax.random.normal(k, (fan_in, fan_out), jnp.float32) / np.sqrt(fan_in)
        b = jnp.zeros((1, fan_out), jnp.float32)
        return w, b

    w0, b0 = lin(k0, OBS_DIM, HIDDEN_DIM)
    w1, b1 = lin(k1, HIDDEN_DIM, HIDDEN_DIM)
    w2, b2 = lin(k2, HIDDEN_DIM, 2 * ACTION_DIM)
    return (w0, b0, w1, b1, w2, b2)


def reference(obs, params):
    """Pure-JAX reference mirroring the kernel's bf16-in / f32-accumulate math."""
    w0, b0, w1, b1, w2, b2 = params
    q = lambda a: a.astype(jnp.bfloat16).astype(jnp.float32)
    hp = jax.lax.Precision.HIGHEST
    h = jnp.maximum(jnp.dot(q(obs), q(w0), precision=hp) + q(b0), 0.0)
    h = jnp.maximum(jnp.dot(q(h), q(w1), precision=hp) + q(b1), 0.0)
    out = jnp.dot(q(h), q(w2), precision=hp) + q(b2)
    mu, log_std = out[:, :ACTION_DIM], out[:, ACTION_DIM:]
    log_std = jnp.tanh(log_std)
    ls_min, ls_max = LOG_STD_BOUNDS
    log_std = ls_min + 0.5 * (ls_max - ls_min) * (log_std + 1.0)
    return mu, jnp.exp(log_std), jnp.tanh(mu)


if __name__ == "__main__":
    key = jax.random.PRNGKey(0)
    k_obs, k_par = jax.random.split(key)
    params = init_params(k_par)
    packed = pack_params(params)

    def check(batch, k):
        obs = jax.random.normal(k, (batch, OBS_DIM), jnp.float32)
        mu, std, mean = diag_gaussian_actor(obs, packed)
        jax.block_until_ready((mu, std, mean))
        mu_r, std_r, mean_r = reference(obs, params)
        # bf16 MXU inputs + bf16 output rounding vs. an f32-precision reference:
        # tolerance covers worst-case bf16 rounding of intermediates and outputs.
        tol = dict(rtol=2e-2, atol=2e-2)
        np.testing.assert_allclose(np.asarray(mu), np.asarray(mu_r), **tol)
        np.testing.assert_allclose(np.asarray(std), np.asarray(std_r), **tol)
        np.testing.assert_allclose(np.asarray(mean), np.asarray(mean_r), **tol)

    check(BATCH, k_obs)                      # single (padded-to-16-row) tile
    check(20, jax.random.PRNGKey(2))         # padded, multi-tile path
    check(64, jax.random.PRNGKey(3))         # divisor path: 2 x 32-row tiles, no pad
    print("KERNEL_OK")
</pallas_src>

<mosaic_0001>
module attributes {stable_mosaic.version = 11 : i64} {
  func.func @actor_kernel(%arg0: i32, %arg1: memref<16x16xf32, #tpu.memory_space<vmem>>, %arg2: memref<320x128xbf16, #tpu.memory_space<vmem>>, %arg3: memref<16x128xbf16, #tpu.memory_space<vmem>>) attributes {dimension_semantics = [#tpu.dimension_semantics<parallel>], iteration_bounds = array<i64: 1>, scalar_prefetch = 0 : i64, scratch_operands = 0 : i64, tpu.core_type = #tpu.core_type<tc>, window_params = [{transform_indices = @transform_0, window_bounds = array<i64: 16, 16>}, {pipeline_mode = #tpu.pipeline_mode<synchronous>, transform_indices = @transform_1, window_bounds = array<i64: 320, 128>}, {transform_indices = @transform_2, window_bounds = array<i64: 16, 128>}]} {
    %c0 = arith.constant 0 : index
    %c0_0 = arith.constant 0 : index
    %0 = vector.load %arg1[%c0, %c0_0] : memref<16x16xf32, #tpu.memory_space<vmem>>, vector<16x16xf32>
    %1 = arith.truncf %0 : vector<16x16xf32> to vector<16x16xbf16>
    %c0_1 = arith.constant 0 : index
    %c0_2 = arith.constant 0 : index
    %2 = vector.load %arg2[%c0_1, %c0_2] : memref<320x128xbf16, #tpu.memory_space<vmem>>, vector<16x128xbf16>
    %c272 = arith.constant 272 : index
    %c0_3 = arith.constant 0 : index
    %3 = vector.load %arg2[%c272, %c0_3] : memref<320x128xbf16, #tpu.memory_space<vmem>>, vector<1x128xbf16>
    %4 = arith.extf %3 : vector<1x128xbf16> to vector<1x128xf32>
    %cst = arith.constant dense<0.000000e+00> : vector<16x128xf32>
    %5 = tpu.matmul %1, %2, %cst {dimension_numbers = #tpu.dot_dimension_numbers<[1], [0], [0], [1], [0, 0, 1, 1], [], []>} : vector<16x16xbf16>, vector<16x128xbf16>, vector<16x128xf32> -> vector<16x128xf32>
    %6 = vector.broadcast %4 : vector<1x128xf32> to vector<16x128xf32>
    %7 = arith.addf %5, %6 : vector<16x128xf32>
    %cst_4 = arith.constant 0.000000e+00 : f32
    %8 = vector.broadcast %cst_4 : f32 to vector<16x128xf32>
    %9 = arith.maximumf %7, %8 : vector<16x128xf32>
    %10 = arith.truncf %9 : vector<16x128xf32> to vector<16x128xbf16>
    %c16 = arith.constant 16 : index
    %c0_5 = arith.constant 0 : index
    %11 = vector.load %arg2[%c16, %c0_5] : memref<320x128xbf16, #tpu.memory_space<vmem>>, vector<128x128xbf16>
    %c288 = arith.constant 288 : index
    %c0_6 = arith.constant 0 : index
    %12 = vector.load %arg2[%c288, %c0_6] : memref<320x128xbf16, #tpu.memory_space<vmem>>, vector<1x128xbf16>
    %13 = arith.extf %12 : vector<1x128xbf16> to vector<1x128xf32>
    %cst_7 = arith.constant dense<0.000000e+00> : vector<16x128xf32>
    %14 = tpu.matmul %10, %11, %cst_7 {dimension_numbers = #tpu.dot_dimension_numbers<[1], [0], [0], [1], [0, 0, 1, 1], [], []>} : vector<16x128xbf16>, vector<128x128xbf16>, vector<16x128xf32> -> vector<16x128xf32>
    %15 = vector.broadcast %13 : vector<1x128xf32> to vector<16x128xf32>
    %16 = arith.addf %14, %15 : vector<16x128xf32>
    %cst_8 = arith.constant 0.000000e+00 : f32
    %17 = vector.broadcast %cst_8 : f32 to vector<16x128xf32>
    %18 = arith.maximumf %16, %17 : vector<16x128xf32>
    %19 = arith.truncf %18 : vector<16x128xf32> to vector<16x128xbf16>
    %c144 = arith.constant 144 : index
    %c0_9 = arith.constant 0 : index
    %20 = vector.load %arg2[%c144, %c0_9] : memref<320x128xbf16, #tpu.memory_space<vmem>>, vector<128x128xbf16>
    %c304 = arith.constant 304 : index
    %c0_10 = arith.constant 0 : index
    %21 = vector.load %arg2[%c304, %c0_10] : memref<320x128xbf16, #tpu.memory_space<vmem>>, vector<1x128xbf16>
    %22 = arith.extf %21 : vector<1x128xbf16> to vector<1x128xf32>
    %cst_11 = arith.constant dense<0.000000e+00> : vector<16x128xf32>
    %23 = tpu.matmul %19, %20, %cst_11 {dimension_numbers = #tpu.dot_dimension_numbers<[1], [0], [0], [1], [0, 0, 1, 1], [], []>} : vector<16x128xbf16>, vector<128x128xbf16>, vector<16x128xf32> -> vector<16x128xf32>
    %24 = vector.broadcast %22 : vector<1x128xf32> to vector<16x128xf32>
    %25 = arith.addf %23, %24 : vector<16x128xf32>
    %26 = math.tanh %25 : vector<16x128xf32>
    %cst_12 = arith.constant 1.000000e+00 : f32
    %27 = vector.broadcast %cst_12 : f32 to vector<16x128xf32>
    %28 = arith.addf %26, %27 : vector<16x128xf32>
    %cst_13 = arith.constant 6.000000e+00 : f32
    %29 = vector.broadcast %cst_13 : f32 to vector<16x128xf32>
    %30 = arith.mulf %29, %28 : vector<16x128xf32>
    %cst_14 = arith.constant -1.000000e+01 : f32
    %31 = vector.broadcast %cst_14 : f32 to vector<16x128xf32>
    %32 = arith.addf %31, %30 : vector<16x128xf32>
    %33 = math.exp %32 : vector<16x128xf32>
    %34 = tpu.iota {dimensions = array<i32: 1>} : vector<16x128xi32>
    %c8_i32 = arith.constant 8 : i32
    %35 = vector.broadcast %c8_i32 : i32 to vector<16x128xi32>
    %36 = arith.cmpi slt, %34, %35 : vector<16x128xi32>
    %37 = arith.select %36, %25, %33 : vector<16x128xi1>, vector<16x128xf32>
    %38 = arith.truncf %37 : vector<16x128xf32> to vector<16x128xbf16>
    %c0_15 = arith.constant 0 : index
    %c0_16 = arith.constant 0 : index
    %39 = vector.load %arg3[%c0_15, %c0_16] : memref<16x128xbf16, #tpu.memory_space<vmem>>, vector<16x128xbf16>
    tpu.vector_store %arg3[%c0_15, %c0_16], %38 {strides = array<i32>} : memref<16x128xbf16, #tpu.memory_space<vmem>>, vector<16x128xbf16>,
    return
  }
  func.func @transform_0(%arg0: i32) -> (i32, i32) {
    %c0_i32 = arith.constant 0 : i32
    %c0_i32_0 = arith.constant 0 : i32
    return %arg0, %c0_i32 : i32, i32
  }
  func.func @transform_1(%arg0: i32) -> (i32, i32) {
    %c0_i32 = arith.constant 0 : i32
    %c0_i32_0 = arith.constant 0 : i32
    %c0_i32_1 = arith.constant 0 : i32
    return %c0_i32, %c0_i32_0 : i32, i32
  }
  func.func @transform_2(%arg0: i32) -> (i32, i32) {
    %c0_i32 = arith.constant 0 : i32
    %c0_i32_0 = arith.constant 0 : i32
    return %arg0, %c0_i32 : i32, i32
  }
}

</mosaic_0001>

<llo_original>
// kernel: tpu_custom_call.1
$region0: #{tpu_custom_call.1}
  #allocation0 [shape = 'u32[]', space=smem, size = 0x4, offset = 0x4, fixed_abs, tag = 'smem constant byte address 0x4 - core index']
  #allocation1 [shape = 'u32[144,128]{1,0:T(1,128)}', space=vmem, size = 0x12000, scoped, tag = 'internal scratch']
  %s0 = inlined_call_operand.hbm [shape: f32[16,16], index: 0, kind: input, shape index: {}]
  %s1 = inlined_call_operand.hbm [shape: bf16[320,128], index: 1, kind: input, shape index: {}]
  %s2 = inlined_call_operand.hbm [shape: bf16[16,128], index: 2, kind: output, shape index: {}]
  %s3 = sld [smem:[#allocation0]]
  $region26: #{tpu_custom_call.1} parent=0
    _
  %s5 = ssub.s32 1, %s3
  %s6 = scalar_select 0, %s5, %s3
  $region1: #{tpu_custom_call.1} parent=0
    #allocation2 [shape = 'u8[8192]{0}', space=vmem, size = 0x2000, scoped, tag = 'input window, operand 0, single buffered']
    #allocation3 [shape = 's32[1]{0}', space=sflag, size = 0x4, scoped, tag = 'scoped memory for tpu_custom_call.1']
    #allocation4 [shape = 's32[1]{0}', space=sflag, size = 0x4, scoped, tag = 'scoped memory for tpu_custom_call.1']
    #allocation5 [shape = 'u8[81920]{0}', space=vmem, size = 0x14000, scoped, tag = 'input window, operand 1, single buffered']
    #allocation6 [shape = 's32[1]{0}', space=sflag, size = 0x4, scoped, tag = 'scoped memory for tpu_custom_call.1']
    #allocation7 [shape = 'u8[4096]{0}', space=vmem, size = 0x1000, scoped, tag = 'output window, operand 0, single buffered']
    %7 = vsyncpa [#allocation3], 0
    %8 = vsyncpa [#allocation6], 0
    %9 = vsyncpa [#allocation4], 0
    // Predicated region
    $region2: #{tpu_custom_call.1} parent=1 // pred_check
      _
    $region3: #{tpu_custom_call.1} parent=1 // pred_check_branch
      %11 = sbr.rel (0) target = $region5
    $region4: #{tpu_custom_call.1} parent=1 // pred_region
      %s13 = ssub.s32 256, 256
      %14 = vsyncadd [#allocation3], %s13
      %s15 = sshll.u32 [#allocation2], 4
      %s16 = int_to_ptr.vmem [resolvable:$true] %s15
      %21 = dma.hbm_to_vmem [thread:$0]  %s0, 256, %s16, [#allocation3], 128, 128, 8
    $region5: #{tpu_custom_call.1} parent=1 // pred_fallthru
      _
    // Predicated region
    $region6: #{tpu_custom_call.1} parent=1 // pred_check
      _
    $region7: #{tpu_custom_call.1} parent=1 // pred_check_branch
      %23 = sbr.rel (0) target = $region9
    $region8: #{tpu_custom_call.1} parent=1 // pred_region
      %s25 = ssub.s32 2560, 2560
      %26 = vsyncadd [#allocation6], %s25
      %s27 = sshll.u32 [#allocation5], 4
      %s28 = int_to_ptr.vmem [resolvable:$true] %s27
      %33 = dma.hbm_to_vmem [thread:$0]  %s1, 2560, %s28, [#allocation6], 64, 64, 4
    $region9: #{tpu_custom_call.1} parent=1 // pred_fallthru
      _
    // Predicated region
    $region10: #{tpu_custom_call.1} parent=1 // pred_check
      _
    $region11: #{tpu_custom_call.1} parent=1 // pred_check_branch
      %35 = sbr.rel (0) target = $region13
    $region12: #{tpu_custom_call.1} parent=1 // pred_region
      %36 = dma.done [#allocation3], 256
    $region13: #{tpu_custom_call.1} parent=1 // pred_fallthru
      _
    // Predicated region
    $region14: #{tpu_custom_call.1} parent=1 // pred_check
      _
    $region15: #{tpu_custom_call.1} parent=1 // pred_check_branch
      %38 = sbr.rel (0) target = $region17
    $region16: #{tpu_custom_call.1} parent=1 // pred_region
      %39 = dma.done [#allocation6], 2560
    $region17: #{tpu_custom_call.1} parent=1 // pred_fallthru
      _
    %v41 = vld [vmem:[#allocation2] sm:$0xff]
    %v42 = vld [vmem:[#allocation2 + $0x8] sm:$0xff]
    %v43 = vpack.c.bf16 %v42, %v41
    %v44 = vld [vmem:[#allocation5] sm:$0xf]
    %v45 = vld [vmem:[#allocation5 + $0x4] sm:$0xf]
    %v46 = vld [vmem:[#allocation5 + $0x88] sm:$0x1]
    %v47 = vunpack.c.l.bf16 %v46
    %v48 = vlaneseq
    %v49 = vshrl.u32 %v48, 7
    %v50 = vsub.s32 0, %v49
    %v51 = vrot.slane %v47, %v50
    %v54 = vunpack.c.l.b16 %v44
    %v55 = vunpack.c.l.b16 %v45
    %v56 = vpack.c.b16 %v55, %v54
    %vm58 = vcmask 130048
    %v60 = vsel %vm58, %v43, 0
    %62 = vmatprep.subr.bf16.mxu0 0
    %63 = vmatpush1.bf16.msra.mxu0 0
    %64 = vmatprep.subr.bf16.mxu0 0
    %65 = vmatpush1.bf16.msra.mxu0 0
    %66 = vmatprep.subr.bf16.mxu0 0
    %67 = vmatpush1.bf16.msra.mxu0 0
    %68 = vmatprep.subr.bf16.mxu0 0
    %69 = vmatpush1.bf16.msra.mxu0 0
    %70 = vmatprep.subr.bf16.mxu0 0
    %71 = vmatpush1.bf16.msra.mxu0 0
    %72 = vmatprep.subr.bf16.mxu0 0
    %73 = vmatpush1.bf16.msra.mxu0 0
    %74 = vmatprep.subr.bf16.mxu0 0
    %75 = vmatpush1.bf16.msra.mxu0 0
    %76 = vmatprep.subr.bf16.mxu0 0
    %77 = vmatpush1.bf16.msra.mxu0 %v56
    %78 = vmatprep.subr.bf16.mxu0 0
    %79 = vmatpush2.bf16.msra.mxu0 0
    %80 = vmatprep.subr.bf16.mxu0 0
    %81 = vmatpush2.bf16.msra.mxu0 0
    %82 = vmatprep.subr.bf16.mxu0 0
    %83 = vmatpush2.bf16.msra.mxu0 0
    %84 = vmatprep.subr.bf16.mxu0 0
    %85 = vmatpush2.bf16.msra.mxu0 0
    %86 = vmatprep.subr.bf16.mxu0 0
    %87 = vmatpush2.bf16.msra.mxu0 0
    %88 = vmatprep.subr.bf16.mxu0 0
    %89 = vmatpush2.bf16.msra.mxu0 0
    %90 = vmatprep.subr.bf16.mxu0 0
    %91 = vmatpush2.bf16.msra.mxu0 0
    %92 = vmatprep.subr.bf16.mxu0 0
    %93 = vmatpush2.bf16.msra.mxu0 0
    %94 = vmatprep.mubr.bf16.mxu0 0
    %95 = vmatmul.mubr.bf16.gmra.mxu0 %v60
    %v96 = vpop.f32.mrf.mxu0
    %v97 = vadd.f32 %v51, %v96
    %v98 = vpop.f32.mrf.mxu0
    %v99 = vpop.f32.mrf.mxu0
    %v100 = vadd.f32 %v51, %v99
    %v101 = vpop.f32.mrf.mxu0
    %102 = vdwg.mxu0
    %v103 = vmax.f32 %v97, 0.0
    %v104 = vmax.f32 %v100, 0.0
    %v105 = vpack.c.bf16 %v104, %v103
    %v106 = vld [vmem:[#allocation5 + $0x8] sm:$0xf]
    %v107 = vld [vmem:[#allocation5 + $0xc] sm:$0xf]
    %v108 = vld [vmem:[#allocation5 + $0x10] sm:$0xf]
    %v109 = vld [vmem:[#allocation5 + $0x14] sm:$0xf]
    %v110 = vld [vmem:[#allocation5 + $0x18] sm:$0xf]
    %v111 = vld [vmem:[#allocation5 + $0x1c] sm:$0xf]
    %v112 = vld [vmem:[#allocation5 + $0x20] sm:$0xf]
    %v113 = vld [vmem:[#allocation5 + $0x24] sm:$0xf]
    %v114 = vld [vmem:[#allocation5 + $0x28] sm:$0xf]
    %v115 = vld [vmem:[#allocation5 + $0x2c] sm:$0xf]
    %v116 = vld [vmem:[#allocation5 + $0x30] sm:$0xf]
    %v117 = vld [vmem:[#allocation5 + $0x34] sm:$0xf]
    %v118 = vld [vmem:[#allocation5 + $0x38] sm:$0xf]
    %v119 = vld [vmem:[#allocation5 + $0x3c] sm:$0xf]
    %v120 = vld [vmem:[#allocation5 + $0x40] sm:$0xf]
    %v121 = vld [vmem:[#allocation5 + $0x44] sm:$0xf]
    %v122 = vld [vmem:[#allocation5 + $0x90] sm:$0x1]
    %v123 = vunpack.c.l.bf16 %v122
    %v124 = vlaneseq
    %v125 = vshrl.u32 %v124, 7
    %v126 = vsub.s32 0, %v125
    %v127 = vrot.slane %v123, %v126
    %v144 = vunpack.c.l.b16 %v106
    %v145 = vunpack.c.l.b16 %v107
    %v146 = vunpack.c.l.b16 %v108
    %v147 = vunpack.c.l.b16 %v109
    %v148 = vunpack.c.l.b16 %v110
    %v149 = vunpack.c.l.b16 %v111
    %v150 = vunpack.c.l.b16 %v112
    %v151 = vunpack.c.l.b16 %v113
    %v152 = vunpack.c.l.b16 %v114
    %v153 = vunpack.c.l.b16 %v115
    %v154 = vunpack.c.l.b16 %v116
    %v155 = vunpack.c.l.b16 %v117
    %v156 = vunpack.c.l.b16 %v118
    %v157 = vunpack.c.l.b16 %v119
    %v158 = vunpack.c.l.b16 %v120
    %v159 = vunpack.c.l.b16 %v121
    %v160 = vpack.c.b16 %v145, %v144
    %v161 = vpack.c.b16 %v147, %v146
    %v162 = vpack.c.b16 %v149, %v148
    %v163 = vpack.c.b16 %v151, %v150
    %v164 = vpack.c.b16 %v153, %v152
    %v165 = vpack.c.b16 %v155, %v154
    %v166 = vpack.c.b16 %v157, %v156
    %v167 = vpack.c.b16 %v159, %v158
    %176 = vmatprep.subr.bf16.mxu0 0
    %177 = vmatpush1.bf16.msra.mxu0 %v167
    %178 = vmatprep.subr.bf16.mxu0 0
    %179 = vmatpush1.bf16.msra.mxu0 %v166
    %180 = vmatprep.subr.bf16.mxu0 0
    %181 = vmatpush1.bf16.msra.mxu0 %v165
    %182 = vmatprep.subr.bf16.mxu0 0
    %183 = vmatpush1.bf16.msra.mxu0 %v164
    %184 = vmatprep.subr.bf16.mxu0 0
    %185 = vmatpush1.bf16.msra.mxu0 %v163
    %186 = vmatprep.subr.bf16.mxu0 0
    %187 = vmatpush1.bf16.msra.mxu0 %v162
    %188 = vmatprep.subr.bf16.mxu0 0
    %189 = vmatpush1.bf16.msra.mxu0 %v161
    %190 = vmatprep.subr.bf16.mxu0 0
    %191 = vmatpush1.bf16.msra.mxu0 %v160
    %192 = vmatprep.subr.bf16.mxu0 0
    %193 = vmatpush2.bf16.msra.mxu0 0
    %194 = vmatprep.subr.bf16.mxu0 0
    %195 = vmatpush2.bf16.msra.mxu0 0
    %196 = vmatprep.subr.bf16.mxu0 0
    %197 = vmatpush2.bf16.msra.mxu0 0
    %198 = vmatprep.subr.bf16.mxu0 0
    %199 = vmatpush2.bf16.msra.mxu0 0
    %200 = vmatprep.subr.bf16.mxu0 0
    %201 = vmatpush2.bf16.msra.mxu0 0
    %202 = vmatprep.subr.bf16.mxu0 0
    %203 = vmatpush2.bf16.msra.mxu0 0
    %204 = vmatprep.subr.bf16.mxu0 0
    %205 = vmatpush2.bf16.msra.mxu0 0
    %206 = vmatprep.subr.bf16.mxu0 0
    %207 = vmatpush2.bf16.msra.mxu0 0
    %208 = vmatprep.mubr.bf16.mxu0 0
    %209 = vmatmul.mubr.bf16.gmra.mxu0 %v105
    %v210 = vpop.f32.mrf.mxu0
    %v211 = vadd.f32 %v127, %v210
    %v212 = vpop.f32.mrf.mxu0
    %v213 = vpop.f32.mrf.mxu0
    %v214 = vadd.f32 %v127, %v213
    %v215 = vpop.f32.mrf.mxu0
    %216 = vdwg.mxu0
    %v217 = vmax.f32 %v211, 0.0
    %v218 = vmax.f32 %v214, 0.0
    %v219 = vpack.c.bf16 %v218, %v217
    %v220 = vld [vmem:[#allocation5 + $0x48] sm:$0xf]
    %v221 = vld [vmem:[#allocation5 + $0x4c] sm:$0xf]
    %v222 = vld [vmem:[#allocation5 + $0x50] sm:$0xf]
    %v223 = vld [vmem:[#allocation5 + $0x54] sm:$0xf]
    %v224 = vld [vmem:[#allocation5 + $0x58] sm:$0xf]
    %v225 = vld [vmem:[#allocation5 + $0x5c] sm:$0xf]
    %v226 = vld [vmem:[#allocation5 + $0x60] sm:$0xf]
    %v227 = vld [vmem:[#allocation5 + $0x64] sm:$0xf]
    %v228 = vld [vmem:[#allocation5 + $0x68] sm:$0xf]
    %v229 = vld [vmem:[#allocation5 + $0x6c] sm:$0xf]
    %v230 = vld [vmem:[#allocation5 + $0x70] sm:$0xf]
    %v231 = vld [vmem:[#allocation5 + $0x74] sm:$0xf]
    %v232 = vld [vmem:[#allocation5 + $0x78] sm:$0xf]
    %v233 = vld [vmem:[#allocation5 + $0x7c] sm:$0xf]
    %v234 = vld [vmem:[#allocation5 + $0x80] sm:$0xf]
    %v235 = vld [vmem:[#allocation5 + $0x84] sm:$0xf]
    %v236 = vld [vmem:[#allocation5 + $0x98] sm:$0x1]
    %v237 = vunpack.c.l.bf16 %v236
    %v238 = vlaneseq
    %v239 = vshrl.u32 %v238, 7
    %v240 = vsub.s32 0, %v239
    %v241 = vrot.slane %v237, %v240
    %v258 = vunpack.c.l.b16 %v220
    %v259 = vunpack.c.l.b16 %v221
    %v260 = vunpack.c.l.b16 %v222
    %v261 = vunpack.c.l.b16 %v223
    %v262 = vunpack.c.l.b16 %v224
    %v263 = vunpack.c.l.b16 %v225
    %v264 = vunpack.c.l.b16 %v226
    %v265 = vunpack.c.l.b16 %v227
    %v266 = vunpack.c.l.b16 %v228
    %v267 = vunpack.c.l.b16 %v229
    %v268 = vunpack.c.l.b16 %v230
    %v269 = vunpack.c.l.b16 %v231
    %v270 = vunpack.c.l.b16 %v232
    %v271 = vunpack.c.l.b16 %v233
    %v272 = vunpack.c.l.b16 %v234
    %v273 = vunpack.c.l.b16 %v235
    %v274 = vpack.c.b16 %v259, %v258
    %v275 = vpack.c.b16 %v261, %v260
    %v276 = vpack.c.b16 %v263, %v262
    %v277 = vpack.c.b16 %v265, %v264
    %v278 = vpack.c.b16 %v267, %v266
    %v279 = vpack.c.b16 %v269, %v268
    %v280 = vpack.c.b16 %v271, %v270
    %v281 = vpack.c.b16 %v273, %v272
    %290 = vmatprep.subr.bf16.mxu0 0
    %291 = vmatpush1.bf16.msra.mxu0 %v281
    %292 = vmatprep.subr.bf16.mxu0 0
    %293 = vmatpush1.bf16.msra.mxu0 %v280
    %294 = vmatprep.subr.bf16.mxu0 0
    %295 = vmatpush1.bf16.msra.mxu0 %v279
    %296 = vmatprep.subr.bf16.mxu0 0
    %297 = vmatpush1.bf16.msra.mxu0 %v278
    %298 = vmatprep.subr.bf16.mxu0 0
    %299 = vmatpush1.bf16.msra.mxu0 %v277
    %300 = vmatprep.subr.bf16.mxu0 0
    %301 = vmatpush1.bf16.msra.mxu0 %v276
    %302 = vmatprep.subr.bf16.mxu0 0
    %303 = vmatpush1.bf16.msra.mxu0 %v275
    %304 = vmatprep.subr.bf16.mxu0 0
    %305 = vmatpush1.bf16.msra.mxu0 %v274
    %306 = vmatprep.subr.bf16.mxu0 0
    %307 = vmatpush2.bf16.msra.mxu0 0
    %308 = vmatprep.subr.bf16.mxu0 0
    %309 = vmatpush2.bf16.msra.mxu0 0
    %310 = vmatprep.subr.bf16.mxu0 0
    %311 = vmatpush2.bf16.msra.mxu0 0
    %312 = vmatprep.subr.bf16.mxu0 0
    %313 = vmatpush2.bf16.msra.mxu0 0
    %314 = vmatprep.subr.bf16.mxu0 0
    %315 = vmatpush2.bf16.msra.mxu0 0
    %316 = vmatprep.subr.bf16.mxu0 0
    %317 = vmatpush2.bf16.msra.mxu0 0
    %318 = vmatprep.subr.bf16.mxu0 0
    %319 = vmatpush2.bf16.msra.mxu0 0
    %320 = vmatprep.subr.bf16.mxu0 0
    %321 = vmatpush2.bf16.msra.mxu0 0
    %322 = vmatprep.mubr.bf16.mxu0 0
    %323 = vmatmul.mubr.bf16.gmra.mxu0 %v219
    %v324 = vpop.f32.mrf.mxu0
    %v325 = vadd.f32 %v241, %v324
    %v326 = vpop.f32.mrf.mxu0
    %v327 = vpop.f32.mrf.mxu0
    %v328 = vadd.f32 %v241, %v327
    %v329 = vpop.f32.mrf.mxu0
    %330 = vdwg.mxu0
    %v331 = vtanh.pop %v325
    %v332 = vtanh.pop %v328
    %v333 = vadd.f32 %v331, 1.0
    %v334 = vadd.f32 %v332, 1.0
    %v335 = vmul.f32 %v333, 6.0
    %v336 = vmul.f32 %v334, 6.0
    %v337 = vadd.f32 %v335, -10.0
    %v338 = vadd.f32 %v336, -10.0
    %v339 = vmul.f32 %v337, 1.442695
    %v340 = vpow.pop %v339
    %v341 = vmul.f32 %v338, 1.442695
    %v342 = vpow.pop %v341
    %v343 = vlaneseq
    %v344 = vand.u32 %v343, 127
    %vm345 = vcmp.lt.s32.totalorder %v344, 8
    %v346 = vsel %vm345, %v325, %v340
    %v347 = vsel %vm345, %v328, %v342
    %v348 = vpack.c.bf16 %v347, %v346
    %v350 = vunpack.c.l.b16 %v348
    %v351 = vunpack.c.h.b16 %v348
    %v352 = vpack.c.b16 %v350, %v350
    %v353 = vpack.c.b16 %v351, %v351
    %356 = vst [vmem:[#allocation7] sm:$0xf] %v352
    %357 = vst [vmem:[#allocation7 + $0x4] sm:$0xf] %v353
    // Predicated region
    $region18: #{tpu_custom_call.1} parent=1 // pred_check
      _
    $region19: #{tpu_custom_call.1} parent=1 // pred_check_branch
      %359 = sbr.rel (0) target = $region21
    $region20: #{tpu_custom_call.1} parent=1 // pred_region
      %s361 = ssub.s32 128, 128
      %362 = vsyncadd [#allocation4], %s361
      %s363 = sshll.u32 [#allocation7], 4
      %s364 = int_to_ptr.vmem [resolvable:$true] %s363
      %369 = dma.vmem_to_hbm [thread:$0]  %s364, 128, %s2, [#allocation4], 64, 64, 4
    $region21: #{tpu_custom_call.1} parent=1 // pred_fallthru
      _
    // Predicated region
    $region22: #{tpu_custom_call.1} parent=1 // pred_check
      _
    $region23: #{tpu_custom_call.1} parent=1 // pred_check_branch
      %371 = sbr.rel (0) target = $region25
    $region24: #{tpu_custom_call.1} parent=1 // pred_region
      %372 = dma.done [#allocation4], 128
    $region25: #{tpu_custom_call.1} parent=1 // pred_fallthru
      _
    %373 = vsyncpa [#allocation3], 1
    %374 = vsyncpa [#allocation6], 1
    %375 = vsyncpa [#allocation4], 1

</llo_original>
